<compile_context>
chip_gen: v7x
topology: tpu7x:2x2x1
jax: 0.10.0
libtpu: 0.0.40
codegen_flags: <defaults>
</compile_context>

<pallas_src>
import jax
import jax.numpy as jnp
from jax.experimental import pallas as pl
from jax.experimental.pallas import tpu as pltpu

BATCH = 2
SEQ = 8
HIDDEN = 32
N_CLASSES = 3
VOCAB = 100

OUT_PAD = 128                                 # lane-dense output width (>= N_CLASSES)
VOCAB_PAD = ((VOCAB + 127) // 128) * 128      # rows [VOCAB, VOCAB_PAD) are zero (sentinel)
BATCH_ALIGN = 16                              # bf16 sublane packing for the output tile
MAX_TB = 2048                                 # batch tile cap (sweep 1024/2048/4096 at real B)

assert VOCAB < VOCAB_PAD                      # need at least one zero "masked token" row


def _round_up(x, m):
    return (x + m - 1) // m * m


def classifier_kernel(ids_ref, embwp_ref, b_hid_ref, w1_ref, w2_ref, b2_ref, out_ref):
    vocab_pad = embwp_ref.shape[0]

    ids = ids_ref[...]                                            # (TB, 1) int32
    # (1, Vp) iota broadcast against (TB, 1) ids: no (TB, Vp) int32 temporary;
    # the one-hot is produced directly in bf16, streaming vreg-by-vreg.
    lane_iota = jax.lax.broadcasted_iota(jnp.int32, (1, vocab_pad), 1)
    onehot = (lane_iota == ids).astype(jnp.bfloat16)              # (TB, Vp)

    # BERT-stub gather + pooler folded: pooled = tanh(cls @ Wp + bp)
    #                                          = tanh(onehot @ (emb @ Wp) + bp)
    bp = b_hid_ref[0]                                             # (1, H) f32
    b1 = b_hid_ref[1]                                             # (1, H) f32
    pooled = jnp.tanh(
        jnp.dot(onehot, embwp_ref[...], preferred_element_type=jnp.float32) + bp)

    # output = self.sig(pooled_output); output = self.out1(output); output = self.sig(output)
    # Elementwise chain in f32: portable (v5e has no bf16 VPU/EUP path).
    x = jax.nn.sigmoid(pooled)
    h = jax.nn.sigmoid(
        jnp.dot(x.astype(jnp.bfloat16), w1_ref[...],
                preferred_element_type=jnp.float32) + b1)

    # output = self.drop(output)  -- nn.Dropout(p=0.1) is identity at inference.
    # output = self.out(output)   -- padded to 128 lanes -> unmasked vst; stored
    # as bf16 to halve the dominant HBM writeback at large batch.
    logits = jnp.dot(h.astype(jnp.bfloat16), w2_ref[...],
                     preferred_element_type=jnp.float32) + b2_ref[...]
    out_ref[...] = logits.astype(out_ref.dtype)                   # (TB, 128) bf16


def sentiment_classifier_forward(input_ids, attention_mask, params):
    """input_ids, attention_mask: [B, S] int. Returns logits [B, N_CLASSES] f32."""
    B = input_ids.shape[0]
    B_pad0 = _round_up(max(B, 1), BATCH_ALIGN)
    # Pick TB so large batches produce >= 2 grid steps (v7x: both TensorCores
    # get work via the "parallel" batch axis); cap keeps VMEM tiny everywhere.
    TB = min(MAX_TB, max(BATCH_ALIGN, _round_up((B_pad0 + 1) // 2, BATCH_ALIGN)))
    B_pad = _round_up(B_pad0, TB)

    # Fold the attention mask into the ids: masked CLS positions point at the
    # zero sentinel row (id = VOCAB) of the fused embedding table.  Valid ids
    # are clamped so nothing can alias the sentinel rows.
    ids = jnp.clip(input_ids[:, 0].astype(jnp.int32), 0, VOCAB - 1)
    ids = jnp.where(attention_mask[:, 0] > 0, ids, VOCAB)[:, None]
    if B_pad != B:
        ids = jnp.pad(ids, ((0, B_pad - B), (0, 0)), constant_values=VOCAB)

    grid = (B_pad // TB,)
    out = pl.pallas_call(
        classifier_kernel,
        out_shape=jax.ShapeDtypeStruct((B_pad, OUT_PAD), jnp.bfloat16),
        grid_spec=pltpu.PrefetchScalarGridSpec(
            num_scalar_prefetch=0,
            grid=grid,
            in_specs=[
                # batch-tiled CLS ids
                pl.BlockSpec((TB, 1), lambda i: (i, 0)),
                # VMEM-resident parameters (constant index_map); all tiny here.
                pl.BlockSpec((VOCAB_PAD, HIDDEN), lambda i: (0, 0)),      # emb @ Wp
                pl.BlockSpec((2, 1, HIDDEN), lambda i: (0, 0, 0)),        # bp | b1
                pl.BlockSpec((HIDDEN, HIDDEN), lambda i: (0, 0)),         # w1
                pl.BlockSpec((HIDDEN, OUT_PAD), lambda i: (0, 0)),        # w2 (padded)
                pl.BlockSpec((1, OUT_PAD), lambda i: (0, 0)),             # b2 (padded)
            ],
            out_specs=pl.BlockSpec((TB, OUT_PAD), lambda i: (i, 0)),      # lane-dense
        ),
        # batch axis is embarrassingly parallel -> megacore / v7x second TC.
        compiler_params=pltpu.CompilerParams(
            dimension_semantics=("parallel",)),
    )(ids, params["emb_wp"], params["b_hid"], params["w1"],
      params["w2p"], params["b2p"])
    return out[:B, :N_CLASSES].astype(jnp.float32)


def init_params(key):
    ks = jax.random.split(key, 4)
    scale = 0.02
    # Weights generated as [in_features, out_features].  Real PyTorch nn.Linear
    # checkpoints are [out, in] and must be transposed during packing.
    emb = scale * jax.random.normal(ks[0], (VOCAB, HIDDEN), jnp.float32)
    wp = scale * jax.random.normal(ks[1], (HIDDEN, HIDDEN), jnp.float32)      # BERT pooler
    w1 = scale * jax.random.normal(ks[2], (HIDDEN, HIDDEN), jnp.float32)      # self.out1
    w2 = scale * jax.random.normal(ks[3], (HIDDEN, N_CLASSES), jnp.float32)   # self.out
    bp = jnp.zeros((HIDDEN,), jnp.float32)
    b1 = jnp.zeros((HIDDEN,), jnp.float32)
    b2 = jnp.zeros((N_CLASSES,), jnp.float32)

    # Fold the pooler matmul into the embedding table offline: emb_wp = emb @ Wp.
    # Rows [VOCAB, VOCAB_PAD) stay zero and serve as the masked-token sentinel.
    emb_wp = jnp.zeros((VOCAB_PAD, HIDDEN), jnp.bfloat16)
    emb_wp = emb_wp.at[:VOCAB].set((emb @ wp).astype(jnp.bfloat16))
    b_hid = jnp.stack([bp, b1])[:, None, :]                       # (2, 1, H) f32
    w2p = jnp.zeros((HIDDEN, OUT_PAD), jnp.bfloat16)
    w2p = w2p.at[:, :N_CLASSES].set(w2.astype(jnp.bfloat16))
    b2p = jnp.zeros((1, OUT_PAD), jnp.float32)
    b2p = b2p.at[0, :N_CLASSES].set(b2)
    return {"emb_wp": emb_wp, "b_hid": b_hid, "w1": w1.astype(jnp.bfloat16),
            "w2p": w2p, "b2p": b2p}


def reference_forward(input_ids, attention_mask, params):
    """Pure-JAX reference using the same (bf16-rounded) packed params."""
    ids = jnp.clip(input_ids[:, 0].astype(jnp.int32), 0, VOCAB - 1)
    ids = jnp.where(attention_mask[:, 0] > 0, ids, VOCAB)
    cls_wp = params["emb_wp"].astype(jnp.float32)[ids]            # fused gather + pooler matmul
    pooled = jnp.tanh(cls_wp + params["b_hid"][0])
    x = jax.nn.sigmoid(pooled)
    h = jax.nn.sigmoid(x @ params["w1"].astype(jnp.float32) + params["b_hid"][1])
    logits = h @ params["w2p"].astype(jnp.float32) + params["b2p"]
    return logits[:, :N_CLASSES]


if __name__ == "__main__":
    key = jax.random.PRNGKey(0)
    k_ids, k_params = jax.random.split(key)

    input_ids = jax.random.randint(k_ids, (BATCH, SEQ), 0, VOCAB, dtype=jnp.int32)
    attention_mask = jnp.ones((BATCH, SEQ), jnp.int32)
    params = init_params(k_params)

    logits = sentiment_classifier_forward(input_ids, attention_mask, params)
    logits = jax.block_until_ready(logits)

    assert logits.shape == (BATCH, N_CLASSES)
    assert bool(jnp.all(jnp.isfinite(logits)))

    ref = reference_forward(input_ids, attention_mask, params)
    assert jnp.allclose(logits, ref, atol=2e-2, rtol=2e-2), (logits, ref)

    print("KERNEL_OK")
</pallas_src>

<mosaic_0001>
module attributes {stable_mosaic.version = 11 : i64} {
  func.func @classifier_kernel(%arg0: i32, %arg1: memref<16x1xi32, #tpu.memory_space<vmem>>, %arg2: memref<128x32xbf16, #tpu.memory_space<vmem>>, %arg3: memref<2x1x32xf32, #tpu.memory_space<vmem>>, %arg4: memref<32x32xbf16, #tpu.memory_space<vmem>>, %arg5: memref<32x128xbf16, #tpu.memory_space<vmem>>, %arg6: memref<1x128xf32, #tpu.memory_space<vmem>>, %arg7: memref<16x128xbf16, #tpu.memory_space<vmem>>) attributes {dimension_semantics = [#tpu.dimension_semantics<parallel>], iteration_bounds = array<i64: 1>, scalar_prefetch = 0 : i64, scratch_operands = 0 : i64, tpu.core_type = #tpu.core_type<tc>, window_params = [{transform_indices = @transform_0, window_bounds = array<i64: 16, 1>}, {pipeline_mode = #tpu.pipeline_mode<synchronous>, transform_indices = @transform_1, window_bounds = array<i64: 128, 32>}, {pipeline_mode = #tpu.pipeline_mode<synchronous>, transform_indices = @transform_2, window_bounds = array<i64: 2, 1, 32>}, {pipeline_mode = #tpu.pipeline_mode<synchronous>, transform_indices = @transform_3, window_bounds = array<i64: 32, 32>}, {pipeline_mode = #tpu.pipeline_mode<synchronous>, transform_indices = @transform_4, window_bounds = array<i64: 32, 128>}, {pipeline_mode = #tpu.pipeline_mode<synchronous>, transform_indices = @transform_5, window_bounds = array<i64: 1, 128>}, {transform_indices = @transform_6, window_bounds = array<i64: 16, 128>}]} {
    %c0 = arith.constant 0 : index
    %c0_0 = arith.constant 0 : index
    %0 = vector.load %arg1[%c0, %c0_0] : memref<16x1xi32, #tpu.memory_space<vmem>>, vector<16x1xi32>
    %1 = tpu.iota {dimensions = array<i32: 1>} : vector<1x128xi32>
    %2 = vector.broadcast %1 : vector<1x128xi32> to vector<16x128xi32>
    %3 = vector.broadcast %0 : vector<16x1xi32> to vector<16x128xi32>
    %4 = arith.cmpi eq, %2, %3 : vector<16x128xi32>
    %5 = arith.extui %4 : vector<16x128xi1> to vector<16x128xi32>
    %6 = arith.sitofp %5 : vector<16x128xi32> to vector<16x128xf32>
    %7 = arith.truncf %6 : vector<16x128xf32> to vector<16x128xbf16>
    %c0_1 = arith.constant 0 : index
    %c0_2 = arith.constant 0 : index
    %c0_3 = arith.constant 0 : index
    %8 = vector.load %arg3[%c0_1, %c0_2, %c0_3] : memref<2x1x32xf32, #tpu.memory_space<vmem>>, vector<1x1x32xf32>
    %9 = vector.shape_cast %8 : vector<1x1x32xf32> to vector<1x32xf32>
    %c1 = arith.constant 1 : index
    %c0_4 = arith.constant 0 : index
    %c0_5 = arith.constant 0 : index
    %10 = vector.load %arg3[%c1, %c0_4, %c0_5] : memref<2x1x32xf32, #tpu.memory_space<vmem>>, vector<1x1x32xf32>
    %11 = vector.shape_cast %10 : vector<1x1x32xf32> to vector<1x32xf32>
    %c0_6 = arith.constant 0 : index
    %c0_7 = arith.constant 0 : index
    %12 = vector.load %arg2[%c0_6, %c0_7] : memref<128x32xbf16, #tpu.memory_space<vmem>>, vector<128x32xbf16>
    %cst = arith.constant dense<0.000000e+00> : vector<16x32xf32>
    %13 = tpu.matmul %7, %12, %cst {dimension_numbers = #tpu.dot_dimension_numbers<[1], [0], [0], [1], [0, 0, 1, 1], [], []>} : vector<16x128xbf16>, vector<128x32xbf16>, vector<16x32xf32> -> vector<16x32xf32>
    %14 = vector.broadcast %9 : vector<1x32xf32> to vector<16x32xf32>
    %15 = arith.addf %13, %14 : vector<16x32xf32>
    %16 = math.tanh %15 : vector<16x32xf32>
    %17 = arith.negf %16 : vector<16x32xf32>
    %18 = math.exp %17 : vector<16x32xf32>
    %cst_8 = arith.constant 1.000000e+00 : f32
    %19 = vector.broadcast %cst_8 : f32 to vector<16x32xf32>
    %20 = arith.addf %19, %18 : vector<16x32xf32>
    %21 = arith.divf %19, %20 : vector<16x32xf32>
    %22 = arith.truncf %21 : vector<16x32xf32> to vector<16x32xbf16>
    %c0_9 = arith.constant 0 : index
    %c0_10 = arith.constant 0 : index
    %23 = vector.load %arg4[%c0_9, %c0_10] : memref<32x32xbf16, #tpu.memory_space<vmem>>, vector<32x32xbf16>
    %cst_11 = arith.constant dense<0.000000e+00> : vector<16x32xf32>
    %24 = tpu.matmul %22, %23, %cst_11 {dimension_numbers = #tpu.dot_dimension_numbers<[1], [0], [0], [1], [0, 0, 1, 1], [], []>} : vector<16x32xbf16>, vector<32x32xbf16>, vector<16x32xf32> -> vector<16x32xf32>
    %25 = vector.broadcast %11 : vector<1x32xf32> to vector<16x32xf32>
    %26 = arith.addf %24, %25 : vector<16x32xf32>
    %27 = arith.negf %26 : vector<16x32xf32>
    %28 = math.exp %27 : vector<16x32xf32>
    %cst_12 = arith.constant 1.000000e+00 : f32
    %29 = vector.broadcast %cst_12 : f32 to vector<16x32xf32>
    %30 = arith.addf %29, %28 : vector<16x32xf32>
    %31 = arith.divf %29, %30 : vector<16x32xf32>
    %32 = arith.truncf %31 : vector<16x32xf32> to vector<16x32xbf16>
    %c0_13 = arith.constant 0 : index
    %c0_14 = arith.constant 0 : index
    %33 = vector.load %arg5[%c0_13, %c0_14] : memref<32x128xbf16, #tpu.memory_space<vmem>>, vector<32x128xbf16>
    %cst_15 = arith.constant dense<0.000000e+00> : vector<16x128xf32>
    %34 = tpu.matmul %32, %33, %cst_15 {dimension_numbers = #tpu.dot_dimension_numbers<[1], [0], [0], [1], [0, 0, 1, 1], [], []>} : vector<16x32xbf16>, vector<32x128xbf16>, vector<16x128xf32> -> vector<16x128xf32>
    %c0_16 = arith.constant 0 : index
    %c0_17 = arith.constant 0 : index
    %35 = vector.load %arg6[%c0_16, %c0_17] : memref<1x128xf32, #tpu.memory_space<vmem>>, vector<1x128xf32>
    %36 = vector.broadcast %35 : vector<1x128xf32> to vector<16x128xf32>
    %37 = arith.addf %34, %36 : vector<16x128xf32>
    %38 = arith.truncf %37 : vector<16x128xf32> to vector<16x128xbf16>
    %c0_18 = arith.constant 0 : index
    %c0_19 = arith.constant 0 : index
    %39 = vector.load %arg7[%c0_18, %c0_19] : memref<16x128xbf16, #tpu.memory_space<vmem>>, vector<16x128xbf16>
    tpu.vector_store %arg7[%c0_18, %c0_19], %38 {strides = array<i32>} : memref<16x128xbf16, #tpu.memory_space<vmem>>, vector<16x128xbf16>,
    return
  }
  func.func @transform_0(%arg0: i32) -> (i32, i32) {
    %c0_i32 = arith.constant 0 : i32
    %c0_i32_0 = arith.constant 0 : i32
    return %arg0, %c0_i32 : i32, i32
  }
  func.func @transform_1(%arg0: i32) -> (i32, i32) {
    %c0_i32 = arith.constant 0 : i32
    %c0_i32_0 = arith.constant 0 : i32
    %c0_i32_1 = arith.constant 0 : i32
    return %c0_i32, %c0_i32_0 : i32, i32
  }
  func.func @transform_2(%arg0: i32) -> (i32, i32, i32) {
    %c0_i32 = arith.constant 0 : i32
    %c0_i32_0 = arith.constant 0 : i32
    %c0_i32_1 = arith.constant 0 : i32
    %c0_i32_2 = arith.constant 0 : i32
    return %c0_i32, %c0_i32_0, %c0_i32_1 : i32, i32, i32
  }
  func.func @transform_3(%arg0: i32) -> (i32, i32) {
    %c0_i32 = arith.constant 0 : i32
    %c0_i32_0 = arith.constant 0 : i32
    %c0_i32_1 = arith.constant 0 : i32
    return %c0_i32, %c0_i32_0 : i32, i32
  }
  func.func @transform_4(%arg0: i32) -> (i32, i32) {
    %c0_i32 = arith.constant 0 : i32
    %c0_i32_0 = arith.constant 0 : i32
    %c0_i32_1 = arith.constant 0 : i32
    return %c0_i32, %c0_i32_0 : i32, i32
  }
  func.func @transform_5(%arg0: i32) -> (i32, i32) {
    %c0_i32 = arith.constant 0 : i32
    %c0_i32_0 = arith.constant 0 : i32
    %c0_i32_1 = arith.constant 0 : i32
    return %c0_i32, %c0_i32_0 : i32, i32
  }
  func.func @transform_6(%arg0: i32) -> (i32, i32) {
    %c0_i32 = arith.constant 0 : i32
    %c0_i32_0 = arith.constant 0 : i32
    return %arg0, %c0_i32 : i32, i32
  }
}

</mosaic_0001>

<llo_original>
// kernel: tpu_custom_call.1
$region0: #{tpu_custom_call.1}
  #allocation0 [shape = 'u32[]', space=smem, size = 0x4, offset = 0x4, fixed_abs, tag = 'smem constant byte address 0x4 - core index']
  #allocation1 [shape = 'u32[144,128]{1,0:T(1,128)}', space=vmem, size = 0x12000, scoped, tag = 'internal scratch']
  %s0 = inlined_call_operand.vmem [shape: s32[16,1], index: 0, kind: input, shape index: {}]
  %s1 = inlined_call_operand.vmem [shape: bf16[128,32], index: 1, kind: input, shape index: {}]
  %s2 = inlined_call_operand.vmem [shape: f32[2,1,32], index: 2, kind: input, shape index: {}]
  %s3 = inlined_call_operand.vmem [shape: bf16[32,32], index: 3, kind: input, shape index: {}]
  %s4 = inlined_call_operand.vmem [shape: bf16[32,128], index: 4, kind: input, shape index: {}]
  %s5 = inlined_call_operand.vmem [shape: f32[1,128], index: 5, kind: input, shape index: {}]
  %s6 = inlined_call_operand.hbm [shape: bf16[16,128], index: 6, kind: output, shape index: {}]
  %s7 = sld [smem:[#allocation0]]
  $region34: #{tpu_custom_call.1} parent=0
    _
  %s9 = ssub.s32 1, %s7
  %s10 = scalar_select 0, %s9, %s7
  $region1: #{tpu_custom_call.1} parent=0
    #allocation2 [shape = 'u8[4096]{0}', space=vmem, size = 0x1000, scoped, tag = 'output window, operand 0, single buffered']
    #allocation3 [shape = 's32[1]{0}', space=sflag, size = 0x4, scoped, tag = 'scoped memory for tpu_custom_call.1']
    %11 = vsyncpa [#allocation3], 0
    // Predicated region
    $region2: #{tpu_custom_call.1} parent=1 // pred_check
      _
    $region3: #{tpu_custom_call.1} parent=1 // pred_check_branch
      %13 = sbr.rel (0) target = $region5
    $region4: #{tpu_custom_call.1} parent=1 // pred_region
      _
    $region5: #{tpu_custom_call.1} parent=1 // pred_fallthru
      _
    // Predicated region
    $region6: #{tpu_custom_call.1} parent=1 // pred_check
      _
    $region7: #{tpu_custom_call.1} parent=1 // pred_check_branch
      %15 = sbr.rel (0) target = $region9
    $region8: #{tpu_custom_call.1} parent=1 // pred_region
      _
    $region9: #{tpu_custom_call.1} parent=1 // pred_fallthru
      _
    // Predicated region
    $region10: #{tpu_custom_call.1} parent=1 // pred_check
      _
    $region11: #{tpu_custom_call.1} parent=1 // pred_check_branch
      %17 = sbr.rel (0) target = $region13
    $region12: #{tpu_custom_call.1} parent=1 // pred_region
      _
    $region13: #{tpu_custom_call.1} parent=1 // pred_fallthru
      _
    // Predicated region
    $region14: #{tpu_custom_call.1} parent=1 // pred_check
      _
    $region15: #{tpu_custom_call.1} parent=1 // pred_check_branch
      %19 = sbr.rel (0) target = $region17
    $region16: #{tpu_custom_call.1} parent=1 // pred_region
      _
    $region17: #{tpu_custom_call.1} parent=1 // pred_fallthru
      _
    // Predicated region
    $region18: #{tpu_custom_call.1} parent=1 // pred_check
      _
    $region19: #{tpu_custom_call.1} parent=1 // pred_check_branch
      %21 = sbr.rel (0) target = $region21
    $region20: #{tpu_custom_call.1} parent=1 // pred_region
      _
    $region21: #{tpu_custom_call.1} parent=1 // pred_fallthru
      _
    // Predicated region
    $region22: #{tpu_custom_call.1} parent=1 // pred_check
      _
    $region23: #{tpu_custom_call.1} parent=1 // pred_check_branch
      %23 = sbr.rel (0) target = $region25
    $region24: #{tpu_custom_call.1} parent=1 // pred_region
      _
    $region25: #{tpu_custom_call.1} parent=1 // pred_fallthru
      _
    %v25 = vld [vmem:[%s0] sm:$0xff]
    %v26 = vld [vmem:[%s0 + $0x8] sm:$0xff]
    %v27 = vlaneseq
    %v28 = vand.u32 %v27, 127
    %29 = vset.pattern.permute.xlu0 0
    %30 = vperm.xlu0 %29, %v25
    %v31 = vpop.permute.xlu0 %30
    %32 = vset.pattern.permute.xlu0 0
    %33 = vperm.xlu0 %32, %v26
    %v34 = vpop.permute.xlu0 %33
    %vm35 = vcmp.eq.s32.totalorder %v28, %v31
    %vm36 = vcmp.eq.s32.totalorder %v28, %v34
    %v37 = vsel %vm35, 1, 0
    %v38 = vsel %vm36, 1, 0
    %v39 = vcvt.s32.f32 %v37
    %v40 = vcvt.s32.f32 %v38
    %v41 = vpack.c.bf16 %v40, %v39
    %v42 = vld [vmem:[%s2] sm:$0x1]
    %s43 = scalar_lea.vmem %s2, 1
    %v44 = vld [vmem:[%s43] sm:$0x1]
    %v45 = vld [vmem:[%s1] sm:$0xf]
    %v46 = vld [vmem:[%s1 + $0x4] sm:$0xf]
    %v47 = vld [vmem:[%s1 + $0x8] sm:$0xf]
    %v48 = vld [vmem:[%s1 + $0xc] sm:$0xf]
    %v49 = vld [vmem:[%s1 + $0x10] sm:$0xf]
    %v50 = vld [vmem:[%s1 + $0x14] sm:$0xf]
    %v51 = vld [vmem:[%s1 + $0x18] sm:$0xf]
    %v52 = vld [vmem:[%s1 + $0x1c] sm:$0xf]
    %v53 = vld [vmem:[%s1 + $0x20] sm:$0xf]
    %v54 = vld [vmem:[%s1 + $0x24] sm:$0xf]
    %v55 = vld [vmem:[%s1 + $0x28] sm:$0xf]
    %v56 = vld [vmem:[%s1 + $0x2c] sm:$0xf]
    %v57 = vld [vmem:[%s1 + $0x30] sm:$0xf]
    %v58 = vld [vmem:[%s1 + $0x34] sm:$0xf]
    %v59 = vld [vmem:[%s1 + $0x38] sm:$0xf]
    %v60 = vld [vmem:[%s1 + $0x3c] sm:$0xf]
    %v62 = vlaneseq
    %v63 = vshrl.u32 %v62, 7
    %v64 = vsub.s32 0, %v63
    %v65 = vrot.slane %v42, %v64
    %v83 = vunpack.c.l.b16 %v45
    %v84 = vunpack.c.l.b16 %v46
    %v85 = vunpack.c.l.b16 %v47
    %v86 = vunpack.c.l.b16 %v48
    %v87 = vunpack.c.l.b16 %v49
    %v88 = vunpack.c.l.b16 %v50
    %v89 = vunpack.c.l.b16 %v51
    %v90 = vunpack.c.l.b16 %v52
    %v91 = vunpack.c.l.b16 %v53
    %v92 = vunpack.c.l.b16 %v54
    %v93 = vunpack.c.l.b16 %v55
    %v94 = vunpack.c.l.b16 %v56
    %v95 = vunpack.c.l.b16 %v57
    %v96 = vunpack.c.l.b16 %v58
    %v97 = vunpack.c.l.b16 %v59
    %v98 = vunpack.c.l.b16 %v60
    %v99 = vpack.c.b16 %v84, %v83
    %v100 = vpack.c.b16 %v86, %v85
    %v101 = vpack.c.b16 %v88, %v87
    %v102 = vpack.c.b16 %v90, %v89
    %v103 = vpack.c.b16 %v92, %v91
    %v104 = vpack.c.b16 %v94, %v93
    %v105 = vpack.c.b16 %v96, %v95
    %v106 = vpack.c.b16 %v98, %v97
    %115 = vmatprep.subr.bf16.mxu0 0
    %116 = vmatpush1.bf16.msra.mxu0 %v99
    %117 = vmatprep.subr.bf16.mxu0 0
    %118 = vmatpush1.bf16.msra.mxu0 %v100
    %119 = vmatprep.subr.bf16.mxu0 0
    %120 = vmatpush1.bf16.msra.mxu0 %v101
    %121 = vmatprep.subr.bf16.mxu0 0
    %122 = vmatpush1.bf16.msra.mxu0 %v102
    %123 = vmatprep.subr.bf16.mxu0 0
    %124 = vmatpush1.bf16.msra.mxu0 %v103
    %125 = vmatprep.subr.bf16.mxu0 0
    %126 = vmatpush1.bf16.msra.mxu0 %v104
    %127 = vmatprep.subr.bf16.mxu0 0
    %128 = vmatpush1.bf16.msra.mxu0 %v105
    %129 = vmatprep.subr.bf16.mxu0 0
    %130 = vmatpush1.bf16.msra.mxu0 %v106
    %131 = vmatprep.subr.bf16.mxu0 0
    %132 = vmatpush1.bf16.msra.mxu0 0
    %133 = vmatprep.subr.bf16.mxu0 0
    %134 = vmatpush1.bf16.msra.mxu0 0
    %135 = vmatprep.subr.bf16.mxu0 0
    %136 = vmatpush1.bf16.msra.mxu0 0
    %137 = vmatprep.subr.bf16.mxu0 0
    %138 = vmatpush1.bf16.msra.mxu0 0
    %139 = vmatprep.subr.bf16.mxu0 0
    %140 = vmatpush1.bf16.msra.mxu0 0
    %141 = vmatprep.subr.bf16.mxu0 0
    %142 = vmatpush1.bf16.msra.mxu0 0
    %143 = vmatprep.subr.bf16.mxu0 0
    %144 = vmatpush1.bf16.msra.mxu0 0
    %145 = vmatprep.subr.bf16.mxu0 0
    %146 = vmatpush1.bf16.msra.mxu0 0
    %147 = vmatprep.mubr.bf16.mxu0 0
    %148 = vmatmul.mubr.bf16.gmra.mrb[0].mxu0 %v41
    %v149 = vpop.f32.mrb[0].mxu0
    %v150 = vadd.f32 %v65, %v149
    %v151 = vpop.f32.mrb[0].mxu0
    %v152 = vpop.f32.mrb[0].mxu0
    %v153 = vadd.f32 %v65, %v152
    %v154 = vpop.f32.mrb[0].mxu0
    %155 = vdwg.mxu0
    %v156 = vtanh.pop %v150
    %v157 = vtanh.pop %v153
    %v158 = vxor.u32 %v156, 2147483648
    %v159 = vxor.u32 %v157, 2147483648
    %v160 = vmul.f32 %v158, 1.442695
    %v161 = vpow.pop %v160
    %v162 = vmul.f32 %v159, 1.442695
    %v163 = vpow.pop %v162
    %v164 = vadd.f32 %v161, 1.0
    %v165 = vadd.f32 %v163, 1.0
    %v166 = vrcp.pop %v164
    %v167 = vmul.f32 1.0, %v166
    %v168 = vrcp.pop %v165
    %v169 = vmul.f32 1.0, %v168
    %v170 = vpack.c.bf16 %v169, %v167
    %v171 = vld [vmem:[%s3] sm:$0xf]
    %v172 = vld [vmem:[%s3 + $0x4] sm:$0xf]
    %v173 = vld [vmem:[%s3 + $0x8] sm:$0xf]
    %v174 = vld [vmem:[%s3 + $0xc] sm:$0xf]
    %v176 = vlaneseq
    %v177 = vshrl.u32 %v176, 7
    %v178 = vsub.s32 0, %v177
    %v179 = vrot.slane %v44, %v178
    %v185 = vunpack.c.l.b16 %v171
    %v186 = vunpack.c.l.b16 %v172
    %v187 = vunpack.c.l.b16 %v173
    %v188 = vunpack.c.l.b16 %v174
    %v189 = vpack.c.b16 %v186, %v185
    %v190 = vpack.c.b16 %v188, %v187
    %vm193 = vcmask 261120
    %v195 = vsel %vm193, %v170, 0
    %197 = vmatprep.subr.bf16.mxu0 0
    %198 = vmatpush1.bf16.msra.mxu0 %v189
    %199 = vmatprep.subr.bf16.mxu0 0
    %200 = vmatpush1.bf16.msra.mxu0 %v190
    %201 = vmatprep.subr.bf16.mxu0 0
    %202 = vmatpush1.bf16.msra.mxu0 0
    %203 = vmatprep.subr.bf16.mxu0 0
    %204 = vmatpush1.bf16.msra.mxu0 0
    %205 = vmatprep.subr.bf16.mxu0 0
    %206 = vmatpush1.bf16.msra.mxu0 0
    %207 = vmatprep.subr.bf16.mxu0 0
    %208 = vmatpush1.bf16.msra.mxu0 0
    %209 = vmatprep.subr.bf16.mxu0 0
    %210 = vmatpush1.bf16.msra.mxu0 0
    %211 = vmatprep.subr.bf16.mxu0 0
    %212 = vmatpush1.bf16.msra.mxu0 0
    %213 = vmatprep.subr.bf16.mxu0 0
    %214 = vmatpush1.bf16.msra.mxu0 0
    %215 = vmatprep.subr.bf16.mxu0 0
    %216 = vmatpush1.bf16.msra.mxu0 0
    %217 = vmatprep.subr.bf16.mxu0 0
    %218 = vmatpush1.bf16.msra.mxu0 0
    %219 = vmatprep.subr.bf16.mxu0 0
    %220 = vmatpush1.bf16.msra.mxu0 0
    %221 = vmatprep.subr.bf16.mxu0 0
    %222 = vmatpush1.bf16.msra.mxu0 0
    %223 = vmatprep.subr.bf16.mxu0 0
    %224 = vmatpush1.bf16.msra.mxu0 0
    %225 = vmatprep.subr.bf16.mxu0 0
    %226 = vmatpush1.bf16.msra.mxu0 0
    %227 = vmatprep.subr.bf16.mxu0 0
    %228 = vmatpush1.bf16.msra.mxu0 0
    %229 = vmatprep.mubr.bf16.mxu0 0
    %230 = vmatmul.mubr.bf16.gmra.mrb[0].mxu0 %v195
    %v231 = vpop.f32.mrb[0].mxu0
    %v232 = vadd.f32 %v179, %v231
    %v233 = vpop.f32.mrb[0].mxu0
    %v234 = vpop.f32.mrb[0].mxu0
    %v235 = vadd.f32 %v179, %v234
    %v236 = vpop.f32.mrb[0].mxu0
    %237 = vdwg.mxu0
    %v238 = vxor.u32 %v232, 2147483648
    %v239 = vxor.u32 %v235, 2147483648
    %v240 = vmul.f32 %v238, 1.442695
    %v241 = vpow.pop %v240
    %v242 = vmul.f32 %v239, 1.442695
    %v243 = vpow.pop %v242
    %v244 = vadd.f32 %v241, 1.0
    %v245 = vadd.f32 %v243, 1.0
    %v246 = vrcp.pop %v244
    %v247 = vmul.f32 1.0, %v246
    %v248 = vrcp.pop %v245
    %v249 = vmul.f32 1.0, %v248
    %v250 = vpack.c.bf16 %v249, %v247
    %v251 = vld [vmem:[%s4] sm:$0xf]
    %v252 = vld [vmem:[%s4 + $0x4] sm:$0xf]
    %v253 = vld [vmem:[%s4 + $0x8] sm:$0xf]
    %v254 = vld [vmem:[%s4 + $0xc] sm:$0xf]
    %v255 = vld [vmem:[%s5] sm:$0x1]
    %v257 = vlaneseq
    %v258 = vshrl.u32 %v257, 7
    %v259 = vsub.s32 0, %v258
    %v260 = vrot.slane %v255, %v259
    %v266 = vunpack.c.l.b16 %v251
    %v267 = vunpack.c.l.b16 %v252
    %v268 = vunpack.c.l.b16 %v253
    %v269 = vunpack.c.l.b16 %v254
    %v270 = vpack.c.b16 %v267, %v266
    %v271 = vpack.c.b16 %v269, %v268
    %v275 = vsel %vm193, %v250, 0
    %277 = vmatprep.subr.bf16.mxu0 0
    %278 = vmatpush1.bf16.msra.mxu0 %v270
    %279 = vmatprep.subr.bf16.mxu0 0
    %280 = vmatpush1.bf16.msra.mxu0 %v271
    %281 = vmatprep.subr.bf16.mxu0 0
    %282 = vmatpush1.bf16.msra.mxu0 0
    %283 = vmatprep.subr.bf16.mxu0 0
    %284 = vmatpush1.bf16.msra.mxu0 0
    %285 = vmatprep.subr.bf16.mxu0 0
    %286 = vmatpush1.bf16.msra.mxu0 0
    %287 = vmatprep.subr.bf16.mxu0 0
    %288 = vmatpush1.bf16.msra.mxu0 0
    %289 = vmatprep.subr.bf16.mxu0 0
    %290 = vmatpush1.bf16.msra.mxu0 0
    %291 = vmatprep.subr.bf16.mxu0 0
    %292 = vmatpush1.bf16.msra.mxu0 0
    %293 = vmatprep.subr.bf16.mxu0 0
    %294 = vmatpush1.bf16.msra.mxu0 0
    %295 = vmatprep.subr.bf16.mxu0 0
    %296 = vmatpush1.bf16.msra.mxu0 0
    %297 = vmatprep.subr.bf16.mxu0 0
    %298 = vmatpush1.bf16.msra.mxu0 0
    %299 = vmatprep.subr.bf16.mxu0 0
    %300 = vmatpush1.bf16.msra.mxu0 0
    %301 = vmatprep.subr.bf16.mxu0 0
    %302 = vmatpush1.bf16.msra.mxu0 0
    %303 = vmatprep.subr.bf16.mxu0 0
    %304 = vmatpush1.bf16.msra.mxu0 0
    %305 = vmatprep.subr.bf16.mxu0 0
    %306 = vmatpush1.bf16.msra.mxu0 0
    %307 = vmatprep.subr.bf16.mxu0 0
    %308 = vmatpush1.bf16.msra.mxu0 0
    %309 = vmatprep.mubr.bf16.mxu0 0
    %310 = vmatmul.mubr.bf16.gmra.mrb[0].mxu0 %v275
    %v311 = vpop.f32.mrb[0].mxu0
    %v312 = vadd.f32 %v260, %v311
    %v313 = vpop.f32.mrb[0].mxu0
    %v314 = vpop.f32.mrb[0].mxu0
    %v315 = vadd.f32 %v260, %v314
    %v316 = vpop.f32.mrb[0].mxu0
    %317 = vdwg.mxu0
    %v318 = vpack.c.bf16 %v315, %v312
    %v320 = vunpack.c.l.b16 %v318
    %v321 = vunpack.c.h.b16 %v318
    %v322 = vpack.c.b16 %v320, %v320
    %v323 = vpack.c.b16 %v321, %v321
    %326 = vst [vmem:[#allocation2] sm:$0xf] %v322
    %327 = vst [vmem:[#allocation2 + $0x4] sm:$0xf] %v323
    // Predicated region
    $region26: #{tpu_custom_call.1} parent=1 // pred_check
      _
    $region27: #{tpu_custom_call.1} parent=1 // pred_check_branch
      %329 = sbr.rel (0) target = $region29
    $region28: #{tpu_custom_call.1} parent=1 // pred_region
      %s331 = ssub.s32 128, 128
      %332 = vsyncadd [#allocation3], %s331
      %s333 = sshll.u32 [#allocation2], 4
      %s334 = int_to_ptr.vmem [resolvable:$true] %s333
      %339 = dma.vmem_to_hbm [thread:$0]  %s334, 128, %s6, [#allocation3], 64, 64, 4
    $region29: #{tpu_custom_call.1} parent=1 // pred_fallthru
      _
    // Predicated region
    $region30: #{tpu_custom_call.1} parent=1 // pred_check
      _
    $region31: #{tpu_custom_call.1} parent=1 // pred_check_branch
      %341 = sbr.rel (0) target = $region33
    $region32: #{tpu_custom_call.1} parent=1 // pred_region
      %342 = dma.done [#allocation3], 128
    $region33: #{tpu_custom_call.1} parent=1 // pred_fallthru
      _
    %343 = vsyncpa [#allocation3], 1

</llo_original>
